<compile_context>
chip_gen: v6e
topology: v6e:2x2x1
jax: 0.10.0
libtpu: 0.0.40
codegen_flags: <defaults>
</compile_context>

<pallas_src>
import math

import jax
import jax.numpy as jnp
from jax.experimental import pallas as pl
from jax.experimental.pallas import tpu as pltpu


# ---------------------------------------------------------------------------
# Helpers
# ---------------------------------------------------------------------------

def _round_up(x, m):
    return ((x + m - 1) // m) * m


def _pick_f_tile(F):
    # 512/256-multiple tiles amortize pipeline overhead on v6e/v7x; 128 keeps
    # v5e's 4x128^2 MXU fed.  Small / odd F falls back to the full extent.
    for t in (512, 256, 128):
        if F >= t and F % t == 0:
            return t
    return F


# ---------------------------------------------------------------------------
# Pallas kernel: batched per-expert MLP on dispatched tokens
# ---------------------------------------------------------------------------

def _expert_mlp_kernel(xd_ref, w1_ref, b1_ref, w2_ref, b2_ref, out_ref, acc_ref):
    # Grid: (expert e [parallel], token tile c [parallel], F chunk f [arbitrary]).
    # The output block is constant across f, so acc_ref is a resident f32
    # accumulator over the F reduction.
    f = pl.program_id(2)

    @pl.when(f == 0)
    def _():
        acc_ref[...] = jnp.zeros_like(acc_ref)

    # [tc, H]bf16 @ [H, TF]bf16 -> f32 on the MXU.
    h1 = jnp.dot(xd_ref[...], w1_ref[...], preferred_element_type=jnp.float32)
    h1 = h1 + b1_ref[...]
    # TODO(synk): torch.nn.GELU defaults to exact erf; tanh-approx GELU is used
    # here (the expert module itself is synthetic -- the spec passes it in).
    act = jax.nn.gelu(h1, approximate=True).astype(w2_ref.dtype)
    # [tc, TF]bf16 @ [TF, H]bf16 -> f32, accumulated over F chunks.
    acc_ref[...] += jnp.dot(act, w2_ref[...], preferred_element_type=jnp.float32)

    @pl.when(f == pl.num_programs(2) - 1)
    def _():
        out_ref[...] = (acc_ref[...] + b2_ref[...]).astype(out_ref.dtype)


def expert_mlp(x_disp, w1, b1, w2, b2, *, tok_tile, f_tile):
    """Batched per-expert MLP on slot-major dispatched tokens.

    x_disp: [E, Cp, H] bf16, w1: [E, H, F] bf16, b1: [E, 1, F] f32,
    w2: [E, F, H] bf16, b2: [E, 1, H] f32  ->  [E, Cp, H] f32
    """
    E, Cp, H = x_disp.shape
    F = w1.shape[2]
    grid = (E, Cp // tok_tile, F // f_tile)
    # Default double-buffering on the weight chunks already overlaps the next
    # expert's / next F-chunk's DMA with compute; deepen via
    # pipeline_mode=pl.Buffered(3) if profiling shows exposed weight DMA.
    return pl.pallas_call(
        _expert_mlp_kernel,
        out_shape=jax.ShapeDtypeStruct((E, Cp, H), jnp.float32),
        grid_spec=pltpu.PrefetchScalarGridSpec(
            num_scalar_prefetch=0,
            grid=grid,
            in_specs=[
                pl.BlockSpec((None, tok_tile, H), lambda e, c, f: (e, c, 0)),  # tokens
                pl.BlockSpec((None, H, f_tile), lambda e, c, f: (e, 0, f)),    # W1 chunk
                pl.BlockSpec((None, 1, f_tile), lambda e, c, f: (e, 0, f)),    # b1 chunk
                pl.BlockSpec((None, f_tile, H), lambda e, c, f: (e, f, 0)),    # W2 chunk
                pl.BlockSpec((None, 1, H), lambda e, c, f: (e, 0, 0)),         # b2
            ],
            out_specs=pl.BlockSpec((None, tok_tile, H), lambda e, c, f: (e, c, 0)),
            scratch_shapes=[pltpu.VMEM((tok_tile, H), jnp.float32)],
        ),
        compiler_params=pltpu.CompilerParams(
            dimension_semantics=("parallel", "parallel", "arbitrary"),
            vmem_limit_bytes=64 * 1024 * 1024,
        ),
    )(x_disp, w1, b1, w2, b2)


# ---------------------------------------------------------------------------
# MoE forward (gate + routing bookkeeping in JAX, expert MLP in Pallas)
# ---------------------------------------------------------------------------

def moe_forward(hidden_states, params, *, num_experts,
                capacity_factor=1.0, min_capacity=4):
    B, S, H = hidden_states.shape
    N = B * S
    E = num_experts
    x = hidden_states.reshape(N, H).astype(jnp.float32)

    # ---- TopKGate (k=1).  The gate matmul/softmax over E (<<128) lanes is
    # tiny; per the perf review it is left to XLA instead of a Pallas kernel
    # that would suffer masked sub-128-lane stores. ----
    logits = jnp.dot(x, params["wg"], preferred_element_type=jnp.float32)
    gates = jax.nn.softmax(logits, axis=-1)                       # [N, E]

    capacity = max(min_capacity, math.ceil((N / E) * capacity_factor))

    indices1 = jnp.argmax(gates, axis=1)                          # [N]
    mask1 = jax.nn.one_hot(indices1, E, dtype=jnp.int32)          # [N, E]
    exp_counts = jnp.sum(mask1, axis=0)                           # pre-drop counts

    me = jnp.mean(gates, axis=0)
    ce = jnp.mean(mask1.astype(jnp.float32), axis=0)
    l_aux = jnp.sum(me * ce) * E                                  # load-balance loss

    # Position of each token inside its chosen expert (deterministic priority).
    # TODO(synk): use_rts (Random Token Selection) RNG-priority dropping is not
    # implemented; this matches the eval / use_rts=False path.
    locations1 = jnp.cumsum(mask1, axis=0) - 1
    mask1 = mask1 * (locations1 < capacity).astype(jnp.int32)     # capacity drop
    locations1_s = jnp.sum(locations1 * mask1, axis=1)            # slot id (0 if dropped)
    kept = jnp.sum(mask1, axis=1) > 0                             # [N] bool
    gate_val = jnp.sum(gates * mask1.astype(jnp.float32), axis=1)  # [N], 0 if dropped

    # ---- index-based dispatch (no one-hot matmuls, no [E,C,N] masks) ----
    tok_tile_cap = 256
    c_pad = _round_up(capacity, 8)                # sublane-align capacity
    if c_pad > tok_tile_cap:
        c_pad = _round_up(c_pad, tok_tile_cap)
        tok_tile = tok_tile_cap
    else:
        tok_tile = c_pad
    f_tile = _pick_f_tile(params["w1"].shape[2])

    flat_slot = indices1 * c_pad + locations1_s                   # [N]
    slot_safe = jnp.where(kept, flat_slot, E * c_pad)             # dropped -> overflow
    tok_ids = jnp.arange(N, dtype=jnp.int32)
    token_for_slot = jnp.zeros((E * c_pad + 1,), jnp.int32).at[slot_safe].set(tok_ids)
    slot_filled = jnp.zeros((E * c_pad + 1,), jnp.bool_).at[slot_safe].set(True)
    token_for_slot = token_for_slot[: E * c_pad]
    slot_filled = slot_filled[: E * c_pad]

    x_bf16 = x.astype(jnp.bfloat16)
    x_disp = x_bf16[token_for_slot] * slot_filled[:, None].astype(jnp.bfloat16)
    x_disp = x_disp.reshape(E, c_pad, H)                          # [E, Cp, H] bf16

    # ---- per-expert MLP (Pallas hot path) ----
    expert_out = expert_mlp(
        x_disp,
        params["w1"].astype(jnp.bfloat16), params["b1"],
        params["w2"].astype(jnp.bfloat16), params["b2"],
        tok_tile=tok_tile, f_tile=f_tile)                         # [E, Cp, H] f32

    # ---- index-based combine; dropped tokens explicitly produce zeros ----
    gathered = expert_out.reshape(E * c_pad, H)[flat_slot]        # [N, H]
    out2d = jnp.where(kept[:, None], gate_val[:, None] * gathered, 0.0)

    return out2d.reshape(B, S, H), l_aux, exp_counts


# ---------------------------------------------------------------------------
# Deterministic parameter init (synthetic; shapes from module __init__)
# ---------------------------------------------------------------------------

def init_params(key, H, F, E):
    k_g, k_w1, k_b1, k_w2, k_b2 = jax.random.split(key, 5)
    return {
        # TopKGate: Linear(hidden_size, num_experts, bias=False)
        "wg": jax.random.normal(k_g, (H, E), jnp.float32) / math.sqrt(H),
        # Experts: per-expert MLP  Linear(H,F) -> GELU -> Linear(F,H)
        "w1": jax.random.normal(k_w1, (E, H, F), jnp.float32) / math.sqrt(H),
        "b1": jax.random.normal(k_b1, (E, 1, F), jnp.float32) * 0.01,
        "w2": jax.random.normal(k_w2, (E, F, H), jnp.float32) / math.sqrt(F),
        "b2": jax.random.normal(k_b2, (E, 1, H), jnp.float32) * 0.01,
    }


if __name__ == "__main__":
    B, S, H, F, E = 2, 16, 128, 256, 4   # tokens N = 32, capacity C = 8
    key = jax.random.PRNGKey(0)
    kx, kp = jax.random.split(key)
    hidden_states = jax.random.normal(kx, (B, S, H), dtype=jnp.float32)
    params = init_params(kp, H, F, E)

    fwd = jax.jit(lambda h: moe_forward(h, params, num_experts=E,
                                        capacity_factor=1.0, min_capacity=4))
    output, l_aux, exp_counts = fwd(hidden_states)
    jax.block_until_ready((output, l_aux, exp_counts))

    assert output.shape == (B, S, H)
    assert output.dtype == jnp.float32
    assert exp_counts.shape == (E,)
    assert bool(jnp.isfinite(l_aux)) and bool(jnp.all(jnp.isfinite(output)))
    print("KERNEL_OK")
</pallas_src>

<mosaic_0001>
module attributes {stable_mosaic.version = 11 : i64} {
  func.func @_expert_mlp_kernel(%arg0: i32, %arg1: i32, %arg2: i32, %arg3: memref<1x8x128xbf16, #tpu.memory_space<vmem>>, %arg4: memref<1x128x256xbf16, #tpu.memory_space<vmem>>, %arg5: memref<1x1x256xf32, #tpu.memory_space<vmem>>, %arg6: memref<1x256x128xbf16, #tpu.memory_space<vmem>>, %arg7: memref<1x1x128xf32, #tpu.memory_space<vmem>>, %arg8: memref<1x8x128xf32, #tpu.memory_space<vmem>>, %arg9: memref<8x128xf32, #tpu.memory_space<vmem>>) attributes {dimension_semantics = [#tpu.dimension_semantics<parallel>, #tpu.dimension_semantics<parallel>, #tpu.dimension_semantics<arbitrary>], iteration_bounds = array<i64: 4, 1, 1>, scalar_prefetch = 0 : i64, scratch_operands = 1 : i64, tpu.core_type = #tpu.core_type<tc>, window_params = [{transform_indices = @transform_0, window_bounds = array<i64: 1, 8, 128>}, {transform_indices = @transform_1, window_bounds = array<i64: 1, 128, 256>}, {transform_indices = @transform_2, window_bounds = array<i64: 1, 1, 256>}, {transform_indices = @transform_3, window_bounds = array<i64: 1, 256, 128>}, {transform_indices = @transform_4, window_bounds = array<i64: 1, 1, 128>}, {transform_indices = @transform_5, window_bounds = array<i64: 1, 8, 128>}]} {
    %c0_i32 = arith.constant 0 : i32
    %0 = arith.cmpi eq, %arg2, %c0_i32 : i32
    %1 = arith.extui %0 : i1 to i32
    %c0_i32_0 = arith.constant 0 : i32
    %2 = arith.cmpi ne, %1, %c0_i32_0 : i32
    scf.if %2 {
      %cst_23 = arith.constant 0.000000e+00 : f32
      %35 = vector.broadcast %cst_23 : f32 to vector<8x128xf32>
      %c0_24 = arith.constant 0 : index
      %c0_25 = arith.constant 0 : index
      %36 = vector.load %arg9[%c0_24, %c0_25] : memref<8x128xf32, #tpu.memory_space<vmem>>, vector<8x128xf32>
      tpu.vector_store %arg9[%c0_24, %c0_25], %35 {strides = array<i32>} : memref<8x128xf32, #tpu.memory_space<vmem>>, vector<8x128xf32>,
    } else {
    }
    %c0 = arith.constant 0 : index
    %c0_1 = arith.constant 0 : index
    %c0_2 = arith.constant 0 : index
    %3 = vector.load %arg3[%c0, %c0_1, %c0_2] : memref<1x8x128xbf16, #tpu.memory_space<vmem>>, vector<1x8x128xbf16>
    %4 = vector.shape_cast %3 : vector<1x8x128xbf16> to vector<8x128xbf16>
    %c0_3 = arith.constant 0 : index
    %c0_4 = arith.constant 0 : index
    %c0_5 = arith.constant 0 : index
    %5 = vector.load %arg4[%c0_3, %c0_4, %c0_5] : memref<1x128x256xbf16, #tpu.memory_space<vmem>>, vector<1x128x256xbf16>
    %6 = vector.shape_cast %5 : vector<1x128x256xbf16> to vector<128x256xbf16>
    %cst = arith.constant dense<0.000000e+00> : vector<8x256xf32>
    %7 = tpu.matmul %4, %6, %cst {dimension_numbers = #tpu.dot_dimension_numbers<[1], [0], [0], [1], [0, 0, 1, 1], [], []>} : vector<8x128xbf16>, vector<128x256xbf16>, vector<8x256xf32> -> vector<8x256xf32>
    %c0_6 = arith.constant 0 : index
    %c0_7 = arith.constant 0 : index
    %c0_8 = arith.constant 0 : index
    %8 = vector.load %arg5[%c0_6, %c0_7, %c0_8] : memref<1x1x256xf32, #tpu.memory_space<vmem>>, vector<1x1x256xf32>
    %9 = vector.shape_cast %8 : vector<1x1x256xf32> to vector<1x256xf32>
    %10 = vector.broadcast %9 : vector<1x256xf32> to vector<8x256xf32>
    %11 = arith.addf %7, %10 : vector<8x256xf32>
    %12 = arith.mulf %11, %11 : vector<8x256xf32>
    %13 = arith.mulf %11, %12 : vector<8x256xf32>
    %cst_9 = arith.constant 4.471500e-02 : f32
    %14 = vector.broadcast %cst_9 : f32 to vector<8x256xf32>
    %15 = arith.mulf %14, %13 : vector<8x256xf32>
    %16 = arith.addf %11, %15 : vector<8x256xf32>
    %cst_10 = arith.constant 0.797884583 : f32
    %17 = vector.broadcast %cst_10 : f32 to vector<8x256xf32>
    %18 = arith.mulf %17, %16 : vector<8x256xf32>
    %19 = math.tanh %18 : vector<8x256xf32>
    %cst_11 = arith.constant 1.000000e+00 : f32
    %20 = vector.broadcast %cst_11 : f32 to vector<8x256xf32>
    %21 = arith.addf %20, %19 : vector<8x256xf32>
    %cst_12 = arith.constant 5.000000e-01 : f32
    %22 = vector.broadcast %cst_12 : f32 to vector<8x256xf32>
    %23 = arith.mulf %22, %21 : vector<8x256xf32>
    %24 = arith.mulf %11, %23 : vector<8x256xf32>
    %25 = arith.truncf %24 : vector<8x256xf32> to vector<8x256xbf16>
    %c0_13 = arith.constant 0 : index
    %c0_14 = arith.constant 0 : index
    %26 = vector.load %arg9[%c0_13, %c0_14] : memref<8x128xf32, #tpu.memory_space<vmem>>, vector<8x128xf32>
    %c0_15 = arith.constant 0 : index
    %c0_16 = arith.constant 0 : index
    %c0_17 = arith.constant 0 : index
    %27 = vector.load %arg6[%c0_15, %c0_16, %c0_17] : memref<1x256x128xbf16, #tpu.memory_space<vmem>>, vector<1x256x128xbf16>
    %28 = vector.shape_cast %27 : vector<1x256x128xbf16> to vector<256x128xbf16>
    %cst_18 = arith.constant dense<0.000000e+00> : vector<8x128xf32>
    %29 = tpu.matmul %25, %28, %cst_18 {dimension_numbers = #tpu.dot_dimension_numbers<[1], [0], [0], [1], [0, 0, 1, 1], [], []>} : vector<8x256xbf16>, vector<256x128xbf16>, vector<8x128xf32> -> vector<8x128xf32>
    %30 = arith.addf %26, %29 : vector<8x128xf32>
    %c0_19 = arith.constant 0 : index
    %c0_20 = arith.constant 0 : index
    %31 = vector.load %arg9[%c0_19, %c0_20] : memref<8x128xf32, #tpu.memory_space<vmem>>, vector<8x128xf32>
    tpu.vector_store %arg9[%c0_19, %c0_20], %30 {strides = array<i32>} : memref<8x128xf32, #tpu.memory_space<vmem>>, vector<8x128xf32>,
    %c0_i32_21 = arith.constant 0 : i32
    %32 = arith.cmpi eq, %arg2, %c0_i32_21 : i32
    %33 = arith.extui %32 : i1 to i32
    %c0_i32_22 = arith.constant 0 : i32
    %34 = arith.cmpi ne, %33, %c0_i32_22 : i32
    scf.if %34 {
      %c0_23 = arith.constant 0 : index
      %c0_24 = arith.constant 0 : index
      %35 = vector.load %arg9[%c0_23, %c0_24] : memref<8x128xf32, #tpu.memory_space<vmem>>, vector<8x128xf32>
      %c0_25 = arith.constant 0 : index
      %c0_26 = arith.constant 0 : index
      %c0_27 = arith.constant 0 : index
      %36 = vector.load %arg7[%c0_25, %c0_26, %c0_27] : memref<1x1x128xf32, #tpu.memory_space<vmem>>, vector<1x1x128xf32>
      %37 = vector.shape_cast %36 : vector<1x1x128xf32> to vector<1x128xf32>
      %38 = vector.broadcast %37 : vector<1x128xf32> to vector<8x128xf32>
      %39 = arith.addf %35, %38 : vector<8x128xf32>
      %c0_28 = arith.constant 0 : index
      %c0_29 = arith.constant 0 : index
      %c0_30 = arith.constant 0 : index
      %40 = vector.load %arg8[%c0_28, %c0_29, %c0_30] : memref<1x8x128xf32, #tpu.memory_space<vmem>>, vector<1x8x128xf32>
      %41 = vector.shape_cast %40 : vector<1x8x128xf32> to vector<8x128xf32>
      %42 = vector.shape_cast %39 : vector<8x128xf32> to vector<1x8x128xf32>
      tpu.vector_store %arg8[%c0_28, %c0_29, %c0_30], %42 {strides = array<i32>} : memref<1x8x128xf32, #tpu.memory_space<vmem>>, vector<1x8x128xf32>,
    } else {
    }
    return
  }
  func.func @transform_0(%arg0: i32, %arg1: i32, %arg2: i32) -> (i32, i32, i32) {
    %c0_i32 = arith.constant 0 : i32
    %c0_i32_0 = arith.constant 0 : i32
    return %arg0, %arg1, %c0_i32 : i32, i32, i32
  }
  func.func @transform_1(%arg0: i32, %arg1: i32, %arg2: i32) -> (i32, i32, i32) {
    %c0_i32 = arith.constant 0 : i32
    %c0_i32_0 = arith.constant 0 : i32
    return %arg0, %c0_i32, %arg2 : i32, i32, i32
  }
  func.func @transform_2(%arg0: i32, %arg1: i32, %arg2: i32) -> (i32, i32, i32) {
    %c0_i32 = arith.constant 0 : i32
    %c0_i32_0 = arith.constant 0 : i32
    return %arg0, %c0_i32, %arg2 : i32, i32, i32
  }
  func.func @transform_3(%arg0: i32, %arg1: i32, %arg2: i32) -> (i32, i32, i32) {
    %c0_i32 = arith.constant 0 : i32
    %c0_i32_0 = arith.constant 0 : i32
    return %arg0, %arg2, %c0_i32 : i32, i32, i32
  }
  func.func @transform_4(%arg0: i32, %arg1: i32, %arg2: i32) -> (i32, i32, i32) {
    %c0_i32 = arith.constant 0 : i32
    %c0_i32_0 = arith.constant 0 : i32
    %c0_i32_1 = arith.constant 0 : i32
    return %arg0, %c0_i32, %c0_i32_0 : i32, i32, i32
  }
  func.func @transform_5(%arg0: i32, %arg1: i32, %arg2: i32) -> (i32, i32, i32) {
    %c0_i32 = arith.constant 0 : i32
    %c0_i32_0 = arith.constant 0 : i32
    return %arg0, %arg1, %c0_i32 : i32, i32, i32
  }
}

</mosaic_0001>

<llo_original>
// kernel: _lambda_.1
$region0: #{_lambda_.1}
  #allocation0 [shape = 'u32[]', space=smem, size = 0x4, offset = 0x4, fixed_abs, tag = 'smem constant byte address 0x4 - core index']
  #allocation1 [shape = 'u32[144,128]{1,0:T(1,128)}', space=vmem, size = 0x12000, scoped, tag = 'internal scratch']
  #allocation2 [shape = 'f32[8,128]{1,0:T(8,128)}', space=vmem, size = 0x1000, scoped, tag = 'scratch operand']
  %s0 = inlined_call_operand.vmem [shape: bf16[4,8,128], index: 0, kind: input, shape index: {}]
  %s1 = inlined_call_operand.vmem [shape: bf16[4,128,256], index: 1, kind: input, shape index: {}]
  %s2 = inlined_call_operand.vmem [shape: f32[4,1,256], index: 2, kind: input, shape index: {}]
  %s3 = inlined_call_operand.hbm [shape: bf16[4,256,128], index: 3, kind: input, shape index: {}]
  %s4 = inlined_call_operand.vmem [shape: f32[4,1,128], index: 4, kind: input, shape index: {}]
  %s5 = inlined_call_operand.vmem [shape: f32[4,8,128], index: 5, kind: output, shape index: {}]
  %s6 = sld [smem:[#allocation0]]
  $region65: #{_lambda_.1} parent=0
    _
  %s8 = ssub.s32 1, %s6
  %s9 = scalar_select 0, %s8, %s6
  $region1: #{_lambda_.1} parent=0
    #allocation3 [shape = 'u8[131072]{0}', space=vmem, size = 0x20000, scoped, tag = 'input window, operand 3']
    #allocation4 [shape = 's32[2]{0}', space=sflag, size = 0x8, scoped, tag = 'scoped memory for _lambda_.1']
    %10 = vsyncpa [#allocation4], 0
    %s11 = scalar_lea.sflag [#allocation4], 1
    %12 = vsyncpa %s11, 0
    loop: start=0, step=1, limit=6
    $region2: #{_lambda_.1} parent=1 // loop_pre_header
      _
    $region3: #{_lambda_.1} parent=1 // loop_header
      %s14 = sphi 0, %s18
      %p15 = scmp.ge.s32.totalorder %s14, 6
      %s21 = sphi 0, %s40
      %s22 = sphi 0, %s36
      %s23 = sphi 0, %s32
      %s24 = sphi 0, %s21
      %s25 = sphi 0, %s22
      %s26 = sphi 0, %s23
      %s27 = sphi 0, %s24
      %s28 = sphi 0, %s25
      %s29 = sphi 0, %s26
      %s45 = sphi 0, %s47
      %s48 = sphi 0, %s45
      %s49 = sphi 0, %s48
      %s65 = sphi 0, %s49
      %s73 = sphi 0, %s75
      %s76 = sphi 0, %s73
      %s77 = sphi 0, %s76
      %s93 = sphi 0, %s77
      %s101 = sphi 0, %s103
      %s104 = sphi 0, %s101
      %s105 = sphi 0, %s104
      %s121 = sphi 0, %s105
      %s129 = sphi 0, %s131
      %s132 = sphi 0, %s129
      %s133 = sphi 0, %s132
      %s149 = sphi 0, %s133
      %s155 = sphi 0, %s157
      %s158 = sphi 0, %s155
      %s159 = sphi 0, %s158
      %s175 = sphi 0, %s159
      %s183 = sphi 0, %s185
      %s186 = sphi 0, %s183
      %s187 = sphi 0, %s186
      %s203 = sphi 0, %s187
    $region4: #{_lambda_.1} parent=1 // loop_header_branch
      %17 = sbr.rel (%p15) target = $region8
    $region5: #{_lambda_.1} parent=1 // loop_body
      %s19 = ssub.s32 %s14, 1
      %s20 = ssub.s32 %s14, 2
      %s30 = sadd.s32 1, %s23
      %p31 = scmp.ge.s32.totalorder %s30, 1
      %s32 = scalar_select %p31, 0, %s30
      %s33 = sadd.s32 1, %s22
      %s34 = scalar_select %p31, %s33, %s22
      %p35 = scmp.ge.s32.totalorder %s34, 1
      %s36 = scalar_select %p35, 0, %s34
      %s37 = sadd.s32 1, %s21
      %s38 = scalar_select %p35, %s37, %s21
      %p39 = scmp.ge.s32.totalorder %s38, 4
      %s40 = scalar_select %p39, 0, %s38
      %s41 = ssub.s32 %s21, %s40
      %s42 = ssub.s32 %s22, %s36
      %s43 = sor.u32 %s41, %s42
      %p44 = scmp.eq.s32.totalorder %s43, 0
      %s46 = sadd.s32 %s45, 1
      %s47 = scalar_select %p44, %s45, %s46
      %p50 = pneg %p44
      %p51 = scmp.eq.s32.totalorder %s14, 3
      %p52 = por %p50, %p51
      %p53 = scmp.ne.s32.totalorder %s45, %s48
      %p54 = scmp.eq.s32.totalorder %s14, 0
      %p55 = por %p53, %p54
      %p56 = scmp.ne.s32.totalorder %s45, %s48
      %p57 = scmp.eq.s32.totalorder %s19, 3
      %p58 = por %p56, %p57
      %p59 = scmp.ne.s32.totalorder %s48, %s49
      %p60 = scmp.eq.s32.totalorder %s19, 0
      %p61 = por %p59, %p60
      %p62 = scmp.ne.s32.totalorder %s48, %s49
      %p63 = scmp.eq.s32.totalorder %s20, 3
      %p64 = por %p62, %p63
      %p66 = scmp.ne.s32.totalorder %s49, %s65
      %p67 = scmp.eq.s32.totalorder %s20, 0
      %p68 = por %p66, %p67
      %s69 = ssub.s32 %s21, %s40
      %s70 = ssub.s32 %s23, %s32
      %s71 = sor.u32 %s69, %s70
      %p72 = scmp.eq.s32.totalorder %s71, 0
      %s74 = sadd.s32 %s73, 1
      %s75 = scalar_select %p72, %s73, %s74
      %p78 = pneg %p72
      %p79 = scmp.eq.s32.totalorder %s14, 3
      %p80 = por %p78, %p79
      %p81 = scmp.ne.s32.totalorder %s73, %s76
      %p82 = scmp.eq.s32.totalorder %s14, 0
      %p83 = por %p81, %p82
      %p84 = scmp.ne.s32.totalorder %s73, %s76
      %p85 = scmp.eq.s32.totalorder %s19, 3
      %p86 = por %p84, %p85
      %p87 = scmp.ne.s32.totalorder %s76, %s77
      %p88 = scmp.eq.s32.totalorder %s19, 0
      %p89 = por %p87, %p88
      %p90 = scmp.ne.s32.totalorder %s76, %s77
      %p91 = scmp.eq.s32.totalorder %s20, 3
      %p92 = por %p90, %p91
      %p94 = scmp.ne.s32.totalorder %s77, %s93
      %p95 = scmp.eq.s32.totalorder %s20, 0
      %p96 = por %p94, %p95
      %s97 = ssub.s32 %s21, %s40
      %s98 = ssub.s32 %s23, %s32
      %s99 = sor.u32 %s97, %s98
      %p100 = scmp.eq.s32.totalorder %s99, 0
      %s102 = sadd.s32 %s101, 1
      %s103 = scalar_select %p100, %s101, %s102
      %p106 = pneg %p100
      %p107 = scmp.eq.s32.totalorder %s14, 3
      %p108 = por %p106, %p107
      %p109 = scmp.ne.s32.totalorder %s101, %s104
      %p110 = scmp.eq.s32.totalorder %s14, 0
      %p111 = por %p109, %p110
      %p112 = scmp.ne.s32.totalorder %s101, %s104
      %p113 = scmp.eq.s32.totalorder %s19, 3
      %p114 = por %p112, %p113
      %p115 = scmp.ne.s32.totalorder %s104, %s105
      %p116 = scmp.eq.s32.totalorder %s19, 0
      %p117 = por %p115, %p116
      %p118 = scmp.ne.s32.totalorder %s104, %s105
      %p119 = scmp.eq.s32.totalorder %s20, 3
      %p120 = por %p118, %p119
      %p122 = scmp.ne.s32.totalorder %s105, %s121
      %p123 = scmp.eq.s32.totalorder %s20, 0
      %p124 = por %p122, %p123
      %s125 = ssub.s32 %s21, %s40
      %s126 = ssub.s32 %s23, %s32
      %s127 = sor.u32 %s125, %s126
      %p128 = scmp.eq.s32.totalorder %s127, 0
      %s130 = sadd.s32 %s129, 1
      %s131 = scalar_select %p128, %s129, %s130
      %p134 = pneg %p128
      %p135 = scmp.eq.s32.totalorder %s14, 3
      %p136 = por %p134, %p135
      %p137 = scmp.ne.s32.totalorder %s129, %s132
      %p138 = scmp.eq.s32.totalorder %s14, 0
      %p139 = por %p137, %p138
      %p140 = scmp.ne.s32.totalorder %s129, %s132
      %p141 = scmp.eq.s32.totalorder %s19, 3
      %p142 = por %p140, %p141
      %p143 = scmp.ne.s32.totalorder %s132, %s133
      %p144 = scmp.eq.s32.totalorder %s19, 0
      %p145 = por %p143, %p144
      %p146 = scmp.ne.s32.totalorder %s132, %s133
      %p147 = scmp.eq.s32.totalorder %s20, 3
      %p148 = por %p146, %p147
      %p150 = scmp.ne.s32.totalorder %s133, %s149
      %p151 = scmp.eq.s32.totalorder %s20, 0
      %p152 = por %p150, %p151
      %s153 = ssub.s32 %s21, %s40
      %p154 = scmp.eq.s32.totalorder %s153, 0
      %s156 = sadd.s32 %s155, 1
      %s157 = scalar_select %p154, %s155, %s156
      %p160 = pneg %p154
      %p161 = scmp.eq.s32.totalorder %s14, 3
      %p162 = por %p160, %p161
      %p163 = scmp.ne.s32.totalorder %s155, %s158
      %p164 = scmp.eq.s32.totalorder %s14, 0
      %p165 = por %p163, %p164
      %p166 = scmp.ne.s32.totalorder %s155, %s158
      %p167 = scmp.eq.s32.totalorder %s19, 3
      %p168 = por %p166, %p167
      %p169 = scmp.ne.s32.totalorder %s158, %s159
      %p170 = scmp.eq.s32.totalorder %s19, 0
      %p171 = por %p169, %p170
      %p172 = scmp.ne.s32.totalorder %s158, %s159
      %p173 = scmp.eq.s32.totalorder %s20, 3
      %p174 = por %p172, %p173
      %p176 = scmp.ne.s32.totalorder %s159, %s175
      %p177 = scmp.eq.s32.totalorder %s20, 0
      %p178 = por %p176, %p177
      %s179 = ssub.s32 %s21, %s40
      %s180 = ssub.s32 %s22, %s36
      %s181 = sor.u32 %s179, %s180
      %p182 = scmp.eq.s32.totalorder %s181, 0
      %s184 = sadd.s32 %s183, 1
      %s185 = scalar_select %p182, %s183, %s184
      %p188 = pneg %p182
      %p189 = scmp.eq.s32.totalorder %s14, 3
      %p190 = por %p188, %p189
      %p191 = scmp.ne.s32.totalorder %s183, %s186
      %p192 = scmp.eq.s32.totalorder %s14, 0
      %p193 = por %p191, %p192
      %p194 = scmp.ne.s32.totalorder %s183, %s186
      %p195 = scmp.eq.s32.totalorder %s19, 3
      %p196 = por %p194, %p195
      %p197 = scmp.ne.s32.totalorder %s186, %s187
      %p198 = scmp.eq.s32.totalorder %s19, 0
      %p199 = por %p197, %p198
      %p200 = scmp.ne.s32.totalorder %s186, %s187
      %p201 = scmp.eq.s32.totalorder %s20, 3
      %p202 = por %p200, %p201
      %p204 = scmp.ne.s32.totalorder %s187, %s203
      %p205 = scmp.eq.s32.totalorder %s20, 0
      %p206 = por %p204, %p205
      %p207 = scmp.le.s32.totalorder 1, %s14
      %p208 = scmp.lt.s32.totalorder %s14, 5
      %p209 = pnand %p207, %p208
      %p210 = pneg %p209
      // Predicated region
      $region9: #{_lambda_.1} parent=5 // pred_check
        _
      $region10: #{_lambda_.1} parent=5 // pred_check_branch
        %212 = sbr.rel (%p209) target = $region12
      $region11: #{_lambda_.1} parent=5 // pred_region
        %s213 = ssub.s32 %s14, 1
      $region12: #{_lambda_.1} parent=5 // pred_fallthru
        _
      %p214 = scmp.lt.s32.totalorder %s14, 4
      // Predicated region
      $region13: #{_lambda_.1} parent=5 // pred_check
        %p215 = pneg %p214
      $region14: #{_lambda_.1} parent=5 // pred_check_branch
        %217 = sbr.rel (%p215) target = $region16
      $region15: #{_lambda_.1} parent=5 // pred_region
        // Predicated region
        $region17: #{_lambda_.1} parent=15 // pred_check
          %p218 = pneg %p55
        $region18: #{_lambda_.1} parent=15 // pred_check_branch
          %220 = sbr.rel (%p218) target = $region20
        $region19: #{_lambda_.1} parent=15 // pred_region
          %p221 = scmp.lt.s32.totalorder %s21, 3
          %s222 = scalar_select %p221, %s21, 3
          %p223 = scmp.lt.s32.totalorder %s22, 0
          %s224 = scalar_select %p223, %s22, 0
          %s225 = sadd.s32 %s224, %s222
          %s226 = smul.addr %s225, 4
          %s227 = scalar_lea.vmem %s0, %s226
        $region20: #{_lambda_.1} parent=15 // pred_fallthru
          _
        // Predicated region
        $region21: #{_lambda_.1} parent=15 // pred_check
          %p228 = pneg %p83
        $region22: #{_lambda_.1} parent=15 // pred_check_branch
          %230 = sbr.rel (%p228) target = $region24
        $region23: #{_lambda_.1} parent=15 // pred_region
          %s231 = smul.u32 2, %s23
          %p232 = scmp.lt.s32.totalorder %s21, 3
          %s233 = scalar_select %p232, %s21, 3
          %p234 = scmp.lt.s32.totalorder %s231, 1
          %s235 = scalar_select %p234, %s231, 1
          %s236 = smul.addr %s233, 32
          %s237 = sadd.s32 %s235, %s236
          %s238 = smul.addr %s237, 4
          %s239 = scalar_lea.vmem %s1, %s238
          %s240 = smul.u32 2, %s23
        $region24: #{_lambda_.1} parent=15 // pred_fallthru
          _
        // Predicated region
        $region25: #{_lambda_.1} parent=15 // pred_check
          %p241 = pneg %p111
        $region26: #{_lambda_.1} parent=15 // pred_check_branch
          %243 = sbr.rel (%p241) target = $region28
        $region27: #{_lambda_.1} parent=15 // pred_region
          %s244 = smul.u32 2, %s23
          %p245 = scmp.lt.s32.totalorder %s21, 3
          %s246 = scalar_select %p245, %s21, 3
          %p247 = scmp.lt.s32.totalorder %s244, 1
          %s248 = scalar_select %p247, %s244, 1
          %s249 = smul.addr %s246, 2
          %s250 = sadd.s32 %s248, %s249
          %s251 = scalar_lea.vmem %s2, %s250
          %s252 = smul.u32 2, %s23
        $region28: #{_lambda_.1} parent=15 // pred_fallthru
          _
        // Predicated region
        $region29: #{_lambda_.1} parent=15 // pred_check
          %p253 = pneg %p139
        $region30: #{_lambda_.1} parent=15 // pred_check_branch
          %255 = sbr.rel (%p253) target = $region32
        $region31: #{_lambda_.1} parent=15 // pred_region
          %s256 = sand.u32 %s129, 1
          %s257 = scalar_lea.sflag [#allocation4], %s256
          %s258 = sand.u32 %s129, 1
          %s259 = smul.addr %s258, 128
          %s260 = scalar_lea.vmem [#allocation3], %s259
          %s261 = smul.u32 32, %s23
          %s263 = ssub.s32 2048, 2048
          %264 = vsyncadd %s257, %s263
          %s265 = smul.addr %s21, 32
          %s266 = sadd.s32 %s261, %s265
          %s267 = smul.addr %s266, 64
          %s268 = scalar_lea.hbm %s3, %s267
          %s269 = sshll.u32 %s260, 4
          %s270 = int_to_ptr.vmem [resolvable:$true] %s269
          %275 = dma.hbm_to_vmem [thread:$0]  %s268, 2048, %s270, %s257, 64, 64, 4
        $region32: #{_lambda_.1} parent=15 // pred_fallthru
          _
        // Predicated region
        $region33: #{_lambda_.1} parent=15 // pred_check
          %p276 = pneg %p165
        $region34: #{_lambda_.1} parent=15 // pred_check_branch
          %278 = sbr.rel (%p276) target = $region36
        $region35: #{_lambda_.1} parent=15 // pred_region
          %p279 = scmp.lt.s32.totalorder %s21, 3
          %s280 = scalar_select %p279, %s21, 3
          %s281 = scalar_lea.vmem %s4, %s280
        $region36: #{_lambda_.1} parent=15 // pred_fallthru
          _
      $region16: #{_lambda_.1} parent=5 // pred_fallthru
        _
      %p282 = scmp.le.s32.totalorder 1, %s14
      %p283 = scmp.lt.s32.totalorder %s14, 5
      %p284 = pnand %p282, %p283
      %p285 = pneg %p284
      // Predicated region
      $region37: #{_lambda_.1} parent=5 // pred_check
        _
      $region38: #{_lambda_.1} parent=5 // pred_check_branch
        %287 = sbr.rel (%p284) target = $region40
      $region39: #{_lambda_.1} parent=5 // pred_region
        %s288 = ssub.s32 %s14, 1
        %s289 = sand.u32 %s132, 1
        %s290 = scalar_lea.sflag [#allocation4], %s289
        %s291 = sand.u32 %s132, 1
        %s292 = smul.addr %s291, 128
        %s293 = scalar_lea.vmem [#allocation3], %s292
        // Predicated region
        $region41: #{_lambda_.1} parent=39 // pred_check
          %p294 = pneg %p145
        $region42: #{_lambda_.1} parent=39 // pred_check_branch
          %296 = sbr.rel (%p294) target = $region44
        $region43: #{_lambda_.1} parent=39 // pred_region
          %297 = dma.done %s290, 2048
        $region44: #{_lambda_.1} parent=39 // pred_fallthru
          _
        %p298 = scmp.lt.s32.totalorder %s24, 3
        %s299 = scalar_select %p298, %s24, 3
        %p300 = scmp.lt.s32.totalorder %s25, 0
        %s301 = scalar_select %p300, %s25, 0
        %s302 = sadd.s32 %s301, %s299
        %s303 = smul.addr %s302, 4
        %s304 = scalar_lea.vmem %s0, %s303
        %p305 = pneg %p61
        %p306 = pneg %p58
        %s307 = smul.u32 2, %s26
        %p308 = scmp.lt.s32.totalorder %s24, 3
        %s309 = scalar_select %p308, %s24, 3
        %p310 = scmp.lt.s32.totalorder %s307, 1
        %s311 = scalar_select %p310, %s307, 1
        %s312 = smul.addr %s309, 32
        %s313 = sadd.s32 %s311, %s312
        %s314 = smul.addr %s313, 4
        %s315 = scalar_lea.vmem %s1, %s314
        %p316 = pneg %p89
        %p317 = pneg %p86
        %s318 = smul.u32 2, %s26
        %p319 = scmp.lt.s32.totalorder %s24, 3
        %s320 = scalar_select %p319, %s24, 3
        %p321 = scmp.lt.s32.totalorder %s318, 1
        %s322 = scalar_select %p321, %s318, 1
        %s323 = smul.addr %s320, 2
        %s324 = sadd.s32 %s322, %s323
        %s325 = scalar_lea.vmem %s2, %s324
        %p326 = pneg %p117
        %p327 = pneg %p114
        %s328 = sand.u32 %s132, 1
        %s329 = scalar_lea.sflag [#allocation4], %s328
        %s330 = sand.u32 %s132, 1
        %s331 = smul.addr %s330, 128
        %s332 = scalar_lea.vmem [#allocation3], %s331
        %p333 = pneg %p145
        %p334 = pneg %p142
        %p335 = scmp.lt.s32.totalorder %s24, 3
        %s336 = scalar_select %p335, %s24, 3
        %s337 = scalar_lea.vmem %s4, %s336
        %p338 = pneg %p171
        %p339 = pneg %p168
        %p340 = pneg %p199
        %p341 = pneg %p196
        %p342 = scmp.lt.s32.totalorder %s24, 3
        %s343 = scalar_select %p342, %s24, 3
        %p344 = scmp.lt.s32.totalorder %s25, 0
        %s345 = scalar_select %p344, %s25, 0
        %s346 = sadd.s32 %s345, %s343
        %s347 = smul.addr %s346, 8
        %s348 = scalar_lea.vmem %s5, %s347
        %p349 = scmp.lt.s32.totalorder %s24, 3
        %s350 = scalar_select %p349, %s24, 3
        %p351 = scmp.lt.s32.totalorder %s25, 0
        %s352 = scalar_select %p351, %s25, 0
        %s353 = sadd.s32 %s352, %s350
        %s354 = smul.addr %s353, 4
        %s355 = scalar_lea.vmem %s0, %s354
        %s356 = smul.u32 2, %s26
        %p357 = scmp.lt.s32.totalorder %s24, 3
        %s358 = scalar_select %p357, %s24, 3
        %p359 = scmp.lt.s32.totalorder %s356, 1
        %s360 = scalar_select %p359, %s356, 1
        %s361 = smul.addr %s358, 32
        %s362 = sadd.s32 %s360, %s361
        %s363 = smul.addr %s362, 4
        %s364 = scalar_lea.vmem %s1, %s363
        %s365 = smul.u32 2, %s26
        %s366 = smul.u32 2, %s26
        %p367 = scmp.lt.s32.totalorder %s24, 3
        %s368 = scalar_select %p367, %s24, 3
        %p369 = scmp.lt.s32.totalorder %s366, 1
        %s370 = scalar_select %p369, %s366, 1
        %s371 = smul.addr %s368, 2
        %s372 = sadd.s32 %s370, %s371
        %s373 = scalar_lea.vmem %s2, %s372
        %s374 = smul.u32 2, %s26
        %s375 = smul.u32 32, %s26
        %p376 = scmp.lt.s32.totalorder %s24, 3
        %s377 = scalar_select %p376, %s24, 3
        %s378 = scalar_lea.vmem %s4, %s377
        %p379 = scmp.lt.s32.totalorder %s24, 3
        %s380 = scalar_select %p379, %s24, 3
        %p381 = scmp.lt.s32.totalorder %s25, 0
        %s382 = scalar_select %p381, %s25, 0
        %s383 = sadd.s32 %s382, %s380
        %s384 = smul.addr %s383, 8
        %s385 = scalar_lea.vmem %s5, %s384
        %p387 = scmp.eq.s32.totalorder %s26, 0
        // Predicated region
        $region45: #{_lambda_.1} parent=39 // pred_check
          %p388 = pneg %p387
        $region46: #{_lambda_.1} parent=39 // pred_check_branch
          %390 = sbr.rel (%p388) target = $region48
        $region47: #{_lambda_.1} parent=39 // pred_region
          %391 = vst [vmem:[#allocation2] sm:$0xff] 0.0
        $region48: #{_lambda_.1} parent=39 // pred_fallthru
          _
        %v392 = vld [vmem:[%s355] sm:$0xf]
        %v393 = vld [vmem:[%s364] sm:$0xff]
        %v394 = vld [vmem:[%s364 + $0x8] sm:$0xff]
        %v395 = vld [vmem:[%s364 + $0x10] sm:$0xff]
        %v396 = vld [vmem:[%s364 + $0x18] sm:$0xff]
        %v397 = vld [vmem:[%s364 + $0x20] sm:$0xff]
        %v398 = vld [vmem:[%s364 + $0x28] sm:$0xff]
        %v399 = vld [vmem:[%s364 + $0x30] sm:$0xff]
        %v400 = vld [vmem:[%s364 + $0x38] sm:$0xff]
        %v401 = vld [vmem:[%s364 + $0x40] sm:$0xff]
        %v402 = vld [vmem:[%s364 + $0x48] sm:$0xff]
        %v403 = vld [vmem:[%s364 + $0x50] sm:$0xff]
        %v404 = vld [vmem:[%s364 + $0x58] sm:$0xff]
        %v405 = vld [vmem:[%s364 + $0x60] sm:$0xff]
        %v406 = vld [vmem:[%s364 + $0x68] sm:$0xff]
        %v407 = vld [vmem:[%s364 + $0x70] sm:$0xff]
        %v408 = vld [vmem:[%s364 + $0x78] sm:$0xff]
        %v409 = vld [vmem:[%s373] sm:$0x3]
        %v411 = vlaneseq
        %v412 = vshrl.u32 %v411, 7
        %v413 = vsub.s32 0, %v412
        %v414 = vrot.slane %v409, %v413
        %v415 = vlaneseq
        %v416 = vshrl.u32 %v415, 7
        %v417 = vsub.s32 1, %v416
        %v418 = vrot.slane %v409, %v417
        %v437 = vunpack.c.l.b16 %v393
        %v438 = vunpack.c.h.b16 %v393
        %v439 = vunpack.c.l.b16 %v394
        %v440 = vunpack.c.h.b16 %v394
        %v441 = vunpack.c.l.b16 %v395
        %v442 = vunpack.c.h.b16 %v395
        %v443 = vunpack.c.l.b16 %v396
        %v444 = vunpack.c.h.b16 %v396
        %v445 = vunpack.c.l.b16 %v397
        %v446 = vunpack.c.h.b16 %v397
        %v447 = vunpack.c.l.b16 %v398
        %v448 = vunpack.c.h.b16 %v398
        %v449 = vunpack.c.l.b16 %v399
        %v450 = vunpack.c.h.b16 %v399
        %v451 = vunpack.c.l.b16 %v400
        %v452 = vunpack.c.h.b16 %v400
        %v453 = vunpack.c.l.b16 %v401
        %v454 = vunpack.c.h.b16 %v401
        %v455 = vunpack.c.l.b16 %v402
        %v456 = vunpack.c.h.b16 %v402
        %v457 = vunpack.c.l.b16 %v403
        %v458 = vunpack.c.h.b16 %v403
        %v459 = vunpack.c.l.b16 %v404
        %v460 = vunpack.c.h.b16 %v404
        %v461 = vunpack.c.l.b16 %v405
        %v462 = vunpack.c.h.b16 %v405
        %v463 = vunpack.c.l.b16 %v406
        %v464 = vunpack.c.h.b16 %v406
        %v465 = vunpack.c.l.b16 %v407
        %v466 = vunpack.c.h.b16 %v407
        %v467 = vunpack.c.l.b16 %v408
        %v468 = vunpack.c.h.b16 %v408
        %v469 = vpack.c.b16 %v439, %v437
        %v470 = vpack.c.b16 %v440, %v438
        %v471 = vpack.c.b16 %v443, %v441
        %v472 = vpack.c.b16 %v444, %v442
        %v473 = vpack.c.b16 %v447, %v445
        %v474 = vpack.c.b16 %v448, %v446
        %v475 = vpack.c.b16 %v451, %v449
        %v476 = vpack.c.b16 %v452, %v450
        %v477 = vpack.c.b16 %v455, %v453
        %v478 = vpack.c.b16 %v456, %v454
        %v479 = vpack.c.b16 %v459, %v457
        %v480 = vpack.c.b16 %v460, %v458
        %v481 = vpack.c.b16 %v463, %v461
        %v482 = vpack.c.b16 %v464, %v462
        %v483 = vpack.c.b16 %v467, %v465
        %v484 = vpack.c.b16 %v468, %v466
        %501 = vmatprep.subr.bf16.mxu0 %v484
        %502 = vmatpush1.bf16.msra.mxu0 %v483
        %503 = vmatprep.subr.bf16.mxu0 %v482
        %504 = vmatpush1.bf16.msra.mxu0 %v481
        %505 = vmatprep.subr.bf16.mxu0 %v480
        %506 = vmatpush1.bf16.msra.mxu0 %v479
        %507 = vmatprep.subr.bf16.mxu0 %v478
        %508 = vmatpush1.bf16.msra.mxu0 %v477
        %509 = vmatprep.subr.bf16.mxu0 %v476
        %510 = vmatpush1.bf16.msra.mxu0 %v475
        %511 = vmatprep.subr.bf16.mxu0 %v474
        %512 = vmatpush1.bf16.msra.mxu0 %v473
        %513 = vmatprep.subr.bf16.mxu0 %v472
        %514 = vmatpush1.bf16.msra.mxu0 %v471
        %515 = vmatprep.subr.bf16.mxu0 %v470
        %516 = vmatpush1.bf16.msra.mxu0 %v469
        %517 = vmatprep.subr.bf16.mxu0 0
        %518 = vmatpush2.bf16.msra.mxu0 0
        %519 = vmatprep.subr.bf16.mxu0 0
        %520 = vmatpush2.bf16.msra.mxu0 0
        %521 = vmatprep.subr.bf16.mxu0 0
        %522 = vmatpush2.bf16.msra.mxu0 0
        %523 = vmatprep.subr.bf16.mxu0 0
        %524 = vmatpush2.bf16.msra.mxu0 0
        %525 = vmatprep.subr.bf16.mxu0 0
        %526 = vmatpush2.bf16.msra.mxu0 0
        %527 = vmatprep.subr.bf16.mxu0 0
        %528 = vmatpush2.bf16.msra.mxu0 0
        %529 = vmatprep.subr.bf16.mxu0 0
        %530 = vmatpush2.bf16.msra.mxu0 0
        %531 = vmatprep.subr.bf16.mxu0 0
        %532 = vmatpush2.bf16.msra.mxu0 0
        %533 = vmatprep.mubr.bf16.mxu0 0
        %534 = vmatmul.mubr.bf16.gmra.mxu0 %v392
        %v535 = vpop.f32.mrf.mxu0
        %v536 = vadd.f32 %v414, %v535
        %v537 = vpop.f32.mrf.mxu0
        %v538 = vadd.f32 %v418, %v537
        %v539 = vpop.f32.mrf.mxu0
        %v540 = vpop.f32.mrf.mxu0
        %541 = vdwg.mxu0
        %v542 = vmul.f32 %v536, %v536
        %v543 = vmul.f32 %v538, %v538
        %v544 = vmul.f32 %v536, %v542
        %v545 = vmul.f32 %v538, %v543
        %v546 = vmul.f32 %v544, 0.044715
        %v547 = vmul.f32 %v545, 0.044715
        %v548 = vadd.f32 %v536, %v546
        %v549 = vadd.f32 %v538, %v547
        %v550 = vmul.f32 %v548, 0.7978846
        %v551 = vmul.f32 %v549, 0.7978846
        %v552 = vtanh.pop %v550
        %v553 = vtanh.pop %v551
        %v554 = vadd.f32 %v552, 1.0
        %v555 = vadd.f32 %v553, 1.0
        %v556 = vmul.f32 %v554, 0.5
        %v557 = vmul.f32 %v555, 0.5
        %v558 = vmul.f32 %v536, %v556
        %v559 = vmul.f32 %v538, %v557
        %v560 = vpack.c.bf16 %v558, %v558
        %v561 = vpack.c.bf16 %v559, %v559
        %v562 = vld [vmem:[#allocation2] sm:$0xff]
        %v563 = vld [vmem:[%s293] sm:$0xf]
        %v564 = vld [vmem:[%s293 + $0x4] sm:$0xf]
        %v565 = vld [vmem:[%s293 + $0x8] sm:$0xf]
        %v566 = vld [vmem:[%s293 + $0xc] sm:$0xf]
        %v567 = vld [vmem:[%s293 + $0x10] sm:$0xf]
        %v568 = vld [vmem:[%s293 + $0x14] sm:$0xf]
        %v569 = vld [vmem:[%s293 + $0x18] sm:$0xf]
        %v570 = vld [vmem:[%s293 + $0x1c] sm:$0xf]
        %v571 = vld [vmem:[%s293 + $0x20] sm:$0xf]
        %v572 = vld [vmem:[%s293 + $0x24] sm:$0xf]
        %v573 = vld [vmem:[%s293 + $0x28] sm:$0xf]
        %v574 = vld [vmem:[%s293 + $0x2c] sm:$0xf]
        %v575 = vld [vmem:[%s293 + $0x30] sm:$0xf]
        %v576 = vld [vmem:[%s293 + $0x34] sm:$0xf]
        %v577 = vld [vmem:[%s293 + $0x38] sm:$0xf]
        %v578 = vld [vmem:[%s293 + $0x3c] sm:$0xf]
        %v579 = vld [vmem:[%s293 + $0x40] sm:$0xf]
        %v580 = vld [vmem:[%s293 + $0x44] sm:$0xf]
        %v581 = vld [vmem:[%s293 + $0x48] sm:$0xf]
        %v582 = vld [vmem:[%s293 + $0x4c] sm:$0xf]
        %v583 = vld [vmem:[%s293 + $0x50] sm:$0xf]
        %v584 = vld [vmem:[%s293 + $0x54] sm:$0xf]
        %v585 = vld [vmem:[%s293 + $0x58] sm:$0xf]
        %v586 = vld [vmem:[%s293 + $0x5c] sm:$0xf]
        %v587 = vld [vmem:[%s293 + $0x60] sm:$0xf]
        %v588 = vld [vmem:[%s293 + $0x64] sm:$0xf]
        %v589 = vld [vmem:[%s293 + $0x68] sm:$0xf]
        %v590 = vld [vmem:[%s293 + $0x6c] sm:$0xf]
        %v591 = vld [vmem:[%s293 + $0x70] sm:$0xf]
        %v592 = vld [vmem:[%s293 + $0x74] sm:$0xf]
        %v593 = vld [vmem:[%s293 + $0x78] sm:$0xf]
        %v594 = vld [vmem:[%s293 + $0x7c] sm:$0xf]
        %v627 = vunpack.c.l.b16 %v563
        %v628 = vunpack.c.l.b16 %v564
        %v629 = vunpack.c.l.b16 %v565
        %v630 = vunpack.c.l.b16 %v566
        %v631 = vunpack.c.l.b16 %v567
        %v632 = vunpack.c.l.b16 %v568
        %v633 = vunpack.c.l.b16 %v569
        %v634 = vunpack.c.l.b16 %v570
        %v635 = vunpack.c.l.b16 %v571
        %v636 = vunpack.c.l.b16 %v572
        %v637 = vunpack.c.l.b16 %v573
        %v638 = vunpack.c.l.b16 %v574
        %v639 = vunpack.c.l.b16 %v575
        %v640 = vunpack.c.l.b16 %v576
        %v641 = vunpack.c.l.b16 %v577
        %v642 = vunpack.c.l.b16 %v578
        %v643 = vunpack.c.l.b16 %v579
        %v644 = vunpack.c.l.b16 %v580
        %v645 = vunpack.c.l.b16 %v581
        %v646 = vunpack.c.l.b16 %v582
        %v647 = vunpack.c.l.b16 %v583
        %v648 = vunpack.c.l.b16 %v584
        %v649 = vunpack.c.l.b16 %v585
        %v650 = vunpack.c.l.b16 %v586
        %v651 = vunpack.c.l.b16 %v587
        %v652 = vunpack.c.l.b16 %v588
        %v653 = vunpack.c.l.b16 %v589
        %v654 = vunpack.c.l.b16 %v590
        %v655 = vunpack.c.l.b16 %v591
        %v656 = vunpack.c.l.b16 %v592
        %v657 = vunpack.c.l.b16 %v593
        %v658 = vunpack.c.l.b16 %v594
        %v659 = vpack.c.b16 %v628, %v627
        %v660 = vpack.c.b16 %v630, %v629
        %v661 = vpack.c.b16 %v632, %v631
        %v662 = vpack.c.b16 %v634, %v633
        %v663 = vpack.c.b16 %v636, %v635
        %v664 = vpack.c.b16 %v638, %v637
        %v665 = vpack.c.b16 %v640, %v639
        %v666 = vpack.c.b16 %v642, %v641
        %v667 = vpack.c.b16 %v644, %v643
        %v668 = vpack.c.b16 %v646, %v645
        %v669 = vpack.c.b16 %v648, %v647
        %v670 = vpack.c.b16 %v650, %v649
        %v671 = vpack.c.b16 %v652, %v651
        %v672 = vpack.c.b16 %v654, %v653
        %v673 = vpack.c.b16 %v656, %v655
        %v674 = vpack.c.b16 %v658, %v657
        %691 = vmatprep.subr.bf16.mxu0 0
        %692 = vmatpush1.bf16.msra.mxu0 %v666
        %693 = vmatprep.subr.bf16.mxu0 0
        %694 = vmatpush1.bf16.msra.mxu0 %v665
        %695 = vmatprep.subr.bf16.mxu0 0
        %696 = vmatpush1.bf16.msra.mxu0 %v664
        %697 = vmatprep.subr.bf16.mxu0 0
        %698 = vmatpush1.bf16.msra.mxu0 %v663
        %699 = vmatprep.subr.bf16.mxu0 0
        %700 = vmatpush1.bf16.msra.mxu0 %v662
        %701 = vmatprep.subr.bf16.mxu0 0
        %702 = vmatpush1.bf16.msra.mxu0 %v661
        %703 = vmatprep.subr.bf16.mxu0 0
        %704 = vmatpush1.bf16.msra.mxu0 %v660
        %705 = vmatprep.subr.bf16.mxu0 0
        %706 = vmatpush1.bf16.msra.mxu0 %v659
        %707 = vmatprep.subr.bf16.mxu0 0
        %708 = vmatpush2.bf16.msra.mxu0 %v674
        %709 = vmatprep.subr.bf16.mxu0 0
        %710 = vmatpush2.bf16.msra.mxu0 %v673
        %711 = vmatprep.subr.bf16.mxu0 0
        %712 = vmatpush2.bf16.msra.mxu0 %v672
        %713 = vmatprep.subr.bf16.mxu0 0
        %714 = vmatpush2.bf16.msra.mxu0 %v671
        %715 = vmatprep.subr.bf16.mxu0 0
        %716 = vmatpush2.bf16.msra.mxu0 %v670
        %717 = vmatprep.subr.bf16.mxu0 0
        %718 = vmatpush2.bf16.msra.mxu0 %v669
        %719 = vmatprep.subr.bf16.mxu0 0
        %720 = vmatpush2.bf16.msra.mxu0 %v668
        %721 = vmatprep.subr.bf16.mxu0 0
        %722 = vmatpush2.bf16.msra.mxu0 %v667
        %723 = vmatprep.mubr.bf16.mxu0 %v561
        %724 = vmatmul.mubr.bf16.gmra.mxu0 %v560
        %v725 = vpop.f32.mrf.mxu0
        %v726 = vadd.f32 0.0, %v725
        %v727 = vpop.f32.mrf.mxu0
        %v728 = vpop.f32.mrf.mxu0
        %v729 = vpop.f32.mrf.mxu0
        %730 = vdwg.mxu0
        %v731 = vadd.f32 %v562, %v726
        %732 = vst [vmem:[#allocation2] sm:$0xff] %v731
        // Predicated region
        $region49: #{_lambda_.1} parent=39 // pred_check
          %p733 = pneg %p387
        $region50: #{_lambda_.1} parent=39 // pred_check_branch
          %735 = sbr.rel (%p733) target = $region52
        $region51: #{_lambda_.1} parent=39 // pred_region
          %v736 = vld [vmem:[#allocation2] sm:$0xff]
          %v737 = vld [vmem:[%s378] sm:$0x1]
          %v739 = vlaneseq
          %v740 = vshrl.u32 %v739, 7
          %v741 = vsub.s32 0, %v740
          %v742 = vrot.slane %v737, %v741
          %v744 = vadd.f32 %v736, %v742
          %745 = vst [vmem:[%s385] sm:$0xff] %v744
        $region52: #{_lambda_.1} parent=39 // pred_fallthru
          _
        %p746 = scmp.lt.s32.totalorder %s24, 3
        %s747 = scalar_select %p746, %s24, 3
        %p748 = scmp.lt.s32.totalorder %s25, 0
        %s749 = scalar_select %p748, %s25, 0
        %s750 = sadd.s32 %s749, %s747
        %s751 = smul.addr %s750, 8
        %s752 = scalar_lea.vmem %s5, %s751
        // Predicated region
        $region53: #{_lambda_.1} parent=39 // pred_check
          %p753 = pneg %p196
        $region54: #{_lambda_.1} parent=39 // pred_check_branch
          %755 = sbr.rel (%p753) target = $region56
        $region55: #{_lambda_.1} parent=39 // pred_region
          _
        $region56: #{_lambda_.1} parent=39 // pred_fallthru
          _
      $region40: #{_lambda_.1} parent=5 // pred_fallthru
        _
      %p756 = scmp.le.s32.totalorder 2, %s14
      // Predicated region
      $region57: #{_lambda_.1} parent=5 // pred_check
        %p757 = pneg %p756
      $region58: #{_lambda_.1} parent=5 // pred_check_branch
        %759 = sbr.rel (%p757) target = $region60
      $region59: #{_lambda_.1} parent=5 // pred_region
        %s760 = ssub.s32 %s14, 2
        // Predicated region
        $region61: #{_lambda_.1} parent=59 // pred_check
          %p761 = pneg %p202
        $region62: #{_lambda_.1} parent=59 // pred_check_branch
          %763 = sbr.rel (%p761) target = $region64
        $region63: #{_lambda_.1} parent=59 // pred_region
          %p764 = scmp.lt.s32.totalorder %s27, 3
          %s765 = scalar_select %p764, %s27, 3
          %p766 = scmp.lt.s32.totalorder %s28, 0
          %s767 = scalar_select %p766, %s28, 0
          %s768 = sadd.s32 %s767, %s765
          %s769 = smul.addr %s768, 8
          %s770 = scalar_lea.vmem %s5, %s769
        $region64: #{_lambda_.1} parent=59 // pred_fallthru
          _
      $region60: #{_lambda_.1} parent=5 // pred_fallthru
        _
    $region6: #{_lambda_.1} parent=1 // loop_footer
      %s18 = sadd.s32 1, %s14
    $region7: #{_lambda_.1} parent=1 // loop_footer_branch
      %13 = sbr.rel target = $region3
    $region8: #{_lambda_.1} parent=1 // loop_exit
      _
    %771 = vsyncpa [#allocation4], 1
    %s772 = scalar_lea.sflag [#allocation4], 1
    %773 = vsyncpa %s772, 1

</llo_original>
